<compile_context>
chip_gen: v6e
topology: v6e:2x2x1
jax: 0.10.0
libtpu: 0.0.40
codegen_flags: <defaults>
</compile_context>

<pallas_src>
import functools

import jax
import jax.numpy as jnp
from jax import lax
from jax.experimental import pallas as pl
from jax.experimental.pallas import tpu as pltpu

EPS = 1e-5


def _round_up(x, m):
    return (x + m - 1) // m * m


def _layernorm_noaffine(y, inv_n):
    """Single-pass (two-moment) LayerNorm over the last axis, no affine, f32 math.

    inv_n = 1 / real_feature_dim.  Padded lanes of `y` are zero so they do not
    perturb the statistics (the nonzero normalized padded lanes are later killed
    by the zero-padded rows of w2 / zero-padded gamma2).
    """
    s1 = jnp.sum(y, axis=-1, keepdims=True)
    s2 = jnp.sum(y * y, axis=-1, keepdims=True)
    mu = s1 * inv_n
    var = jnp.maximum(s2 * inv_n - mu * mu, 0.0)
    return (y - mu) * lax.rsqrt(var + EPS)


def _layernorm(y, gamma, beta, inv_n):
    return _layernorm_noaffine(y, inv_n) * gamma + beta


def resnorm_kernel(x_ref, w1_ref, w2_ref, vec_ref, o_ref, *, inv_n, n_sub):
    w1 = w1_ref[...]                     # (Dp, Dp) bf16 (or f32)
    w2 = w2_ref[...]                     # (Dp, Dp) bf16, LN1 gamma folded in
    vecs = vec_ref[...]                  # (8, Dp) f32: rows = b1, b2', g2, be2, 0...
    b1, b2, g2, be2 = vecs[0:1], vecs[1:2], vecs[2:3], vecs[3:4]

    mxu_dtype = w1.dtype                 # narrow only matmul operands; VPU math f32
    tm = x_ref.shape[0]
    rows = tm // n_sub

    # Two independent half-tiles -> LLO can overlap one half's matmul (MXU) with
    # the other half's ReLU/LayerNorm (VPU/XLU/EUP).
    for h in range(n_sub):
        lo = h * rows                    # static Python int -> static slice
        x_b = x_ref[lo:lo + rows, :]     # bf16 streamed tile
        x_f = x_b.astype(jnp.float32)

        y = jnp.dot(x_b.astype(mxu_dtype), w1,
                    preferred_element_type=jnp.float32) + b1
        y = jnp.maximum(y, 0.0)
        y = _layernorm_noaffine(y, inv_n)          # LN1 affine folded into w2/b2

        y = jnp.dot(y.astype(mxu_dtype), w2,
                    preferred_element_type=jnp.float32) + b2
        y = jnp.maximum(y, 0.0)
        y = _layernorm(y, g2, be2, inv_n)

        o_ref[lo:lo + rows, :] = (x_f + y).astype(o_ref.dtype)


def res_norm_layer(x, params, *, tm=512, out_dtype=None):
    """x: (..., D). params: output of pack_params (padded + packed + folded)."""
    orig_shape = x.shape
    D = orig_shape[-1]
    out_dtype = out_dtype or x.dtype

    # bf16 activation streaming: halves HBM read traffic (kernel is mem-bound for
    # D well past 1000 on v6e/v7x); LN / residual math stays f32 in-kernel.
    x2d = x.reshape(-1, D).astype(jnp.bfloat16)
    M = x2d.shape[0]

    Dp = params["w1_t"].shape[0]
    assert Dp == _round_up(D, 128), "params were packed for a different feature dim"

    # ---- Row tiling: pad rows only to a multiple of 8, pick tm_eff | Mp. ----
    Mp = _round_up(M, 8)
    tm_cap = max(8, min(_round_up(tm, 8), Mp))
    tm_eff = 8
    for t in range(tm_cap, 7, -8):
        if Mp % t == 0:
            tm_eff = t
            break

    # >= 2 grid steps so dimension_semantics=("parallel",) can use both v7x TCs.
    if Mp // tm_eff == 1 and tm_eff % 16 == 0:
        tm_eff //= 2

    # ---- VMEM budget (sized to physical capacity; v7x-safe). ----
    w_item = jnp.dtype(params["w1_t"].dtype).itemsize
    out_item = jnp.dtype(out_dtype).itemsize
    try:
        vmem_cap = int(pltpu.get_tpu_info().vmem_capacity_bytes)
    except Exception:
        vmem_cap = 64 << 20                       # conservative (v7x per-TC)
    vmem_budget_cap = int(vmem_cap * 0.85)

    def footprint(t, single_buffer_weights):
        wbytes = 2 * Dp * Dp * w_item             # both matrices, one copy each
        if not single_buffer_weights:
            wbytes *= 2                           # default double-buffering
        io = 2 * t * Dp * 2 + 2 * t * Dp * out_item   # dbl-buffered bf16 in + out
        vec = 2 * 8 * Dp * 4
        return wbytes + io + vec + (4 << 20)      # headroom

    # Shrink the row tile if the footprint would blow past physical VMEM.
    while (footprint(tm_eff, True) > vmem_budget_cap
           and tm_eff > 8 and tm_eff % 16 == 0):
        tm_eff //= 2

    grid = Mp // tm_eff
    n_sub = 2 if (tm_eff >= 16 and tm_eff % 16 == 0) else 1

    xp = x2d if (Mp == M and Dp == D) else jnp.pad(x2d, ((0, Mp - M), (0, Dp - D)))

    row_spec = pl.BlockSpec((tm_eff, Dp), lambda i: (i, 0))
    kernel = functools.partial(resnorm_kernel, inv_n=1.0 / float(D), n_sub=n_sub)

    def build(single_buffer_weights):
        const_kw = ({"pipeline_mode": pl.Buffered(1)}
                    if single_buffer_weights else {})
        w_spec = pl.BlockSpec((Dp, Dp), lambda i: (0, 0), **const_kw)
        v_spec = pl.BlockSpec((8, Dp), lambda i: (0, 0), **const_kw)
        limit = int(min(max(footprint(tm_eff, single_buffer_weights), 32 << 20),
                        vmem_budget_cap))
        return pl.pallas_call(
            kernel,
            out_shape=jax.ShapeDtypeStruct((Mp, Dp), out_dtype),
            grid_spec=pltpu.PrefetchScalarGridSpec(
                num_scalar_prefetch=0,
                grid=(grid,),
                in_specs=[row_spec, w_spec, w_spec, v_spec],
                out_specs=row_spec,
            ),
            compiler_params=pltpu.CompilerParams(
                dimension_semantics=("parallel",),
                vmem_limit_bytes=limit,
            ),
        )

    args = (xp, params["w1_t"], params["w2_t"], params["vecs"])
    try:
        # Weights / vectors never change block index -> request single buffering.
        out = build(True)(*args)
    except Exception:
        # Fall back to default pipelining; if this also fails, the error propagates
        # (so genuine problems like VMEM OOM are not masked).
        out = build(False)(*args)

    if Mp != M or Dp != D:
        out = out[:M, :D]
    return out.reshape(orig_shape)


def init_params(key, d):
    """Raw parameters matching nn.Linear / nn.LayerNorm default shapes & init."""
    k1, k2, k3, k4 = jax.random.split(key, 4)
    bound = 1.0 / jnp.sqrt(d)
    return dict(
        w1=jax.random.uniform(k1, (d, d), jnp.float32, -bound, bound),  # (out, in)
        b1=jax.random.uniform(k2, (d,), jnp.float32, -bound, bound),
        w2=jax.random.uniform(k3, (d, d), jnp.float32, -bound, bound),
        b2=jax.random.uniform(k4, (d,), jnp.float32, -bound, bound),
        g1=jnp.ones((d,), jnp.float32), be1=jnp.zeros((d,), jnp.float32),
        g2=jnp.ones((d,), jnp.float32), be2=jnp.zeros((d,), jnp.float32),
    )


def pack_params(raw, *, weight_dtype=jnp.bfloat16):
    """Transpose weights to (in, out), fold LN1's gamma/beta into w2/b2, zero-pad
    everything to Dp (multiple of 128), cast weights to the MXU dtype, and pack the
    per-feature vectors (b1, folded b2, g2, be2) into one lane-dense (8, Dp) array."""
    d = raw["w1"].shape[0]
    dp = _round_up(d, 128)

    w1_t = raw["w1"].T                                   # (in, out)
    w2_t = raw["w2"].T * raw["g1"][:, None]              # fold LN1 gamma (row scale)
    b2_f = raw["b2"] + raw["be1"] @ raw["w2"].T          # fold LN1 beta into bias2

    def pad_mat(w):
        return (jnp.zeros((dp, dp), jnp.float32).at[:d, :d].set(w)
                .astype(weight_dtype))

    vecs = jnp.zeros((8, dp), jnp.float32)
    for i, v in enumerate((raw["b1"], b2_f, raw["g2"], raw["be2"])):
        vecs = vecs.at[i, :d].set(v)

    return dict(w1_t=pad_mat(w1_t), w2_t=pad_mat(w2_t), vecs=vecs)


def reference(x, raw, *, weight_dtype=jnp.bfloat16):
    """Plain-JAX mirror of the kernel's math (bf16 streamed x, bf16 matmul operands
    with f32 accumulation, LN1 affine folded into w2/b2, f32 LN/residual math)."""
    d = x.shape[-1]
    x_b = x.reshape(-1, d).astype(jnp.bfloat16)
    x_f = x_b.astype(jnp.float32)

    w1t = raw["w1"].T.astype(weight_dtype)
    w2t = (raw["w2"].T * raw["g1"][:, None]).astype(weight_dtype)
    b2f = raw["b2"] + raw["be1"] @ raw["w2"].T

    y = jnp.dot(x_b.astype(weight_dtype), w1t,
                preferred_element_type=jnp.float32) + raw["b1"]
    y = jnp.maximum(y, 0.0)
    y = _layernorm_noaffine(y, 1.0 / d)

    y = jnp.dot(y.astype(weight_dtype), w2t,
                preferred_element_type=jnp.float32) + b2f
    y = jnp.maximum(y, 0.0)
    y = _layernorm(y, raw["g2"], raw["be2"], 1.0 / d)

    return (x_f + y).reshape(x.shape).astype(x.dtype)


if __name__ == "__main__":
    batch, seq, hidden = 2, 8, 32
    key = jax.random.PRNGKey(0)
    kx, kp = jax.random.split(key)

    x = jax.random.normal(kx, (batch, seq, hidden), jnp.float32)
    raw = init_params(kp, hidden)
    params = pack_params(raw)            # bf16 weights, D padded 32 -> 128

    out = res_norm_layer(x, params)
    jax.block_until_ready(out)

    ref = reference(x, raw)
    # Both kernel and reference stream x in bf16 and use bf16 matmul operands with
    # f32 accumulation, so tolerance reflects bf16 rounding of the activations.
    assert out.shape == x.shape
    assert jnp.allclose(out, ref, atol=5e-3, rtol=5e-3), "mismatch vs reference"
    print("KERNEL_OK")
</pallas_src>

<mosaic_0001>
module attributes {stable_mosaic.version = 11 : i64} {
  func.func @resnorm_kernel(%arg0: i32, %arg1: memref<8x128xbf16, #tpu.memory_space<vmem>>, %arg2: memref<128x128xbf16, #tpu.memory_space<vmem>>, %arg3: memref<128x128xbf16, #tpu.memory_space<vmem>>, %arg4: memref<8x128xf32, #tpu.memory_space<vmem>>, %arg5: memref<8x128xf32, #tpu.memory_space<vmem>>) attributes {dimension_semantics = [#tpu.dimension_semantics<parallel>], iteration_bounds = array<i64: 2>, scalar_prefetch = 0 : i64, scratch_operands = 0 : i64, tpu.core_type = #tpu.core_type<tc>, window_params = [{transform_indices = @transform_0, window_bounds = array<i64: 8, 128>}, {pipeline_mode = #tpu.pipeline_mode<synchronous>, transform_indices = @transform_1, window_bounds = array<i64: 128, 128>}, {pipeline_mode = #tpu.pipeline_mode<synchronous>, transform_indices = @transform_2, window_bounds = array<i64: 128, 128>}, {pipeline_mode = #tpu.pipeline_mode<synchronous>, transform_indices = @transform_3, window_bounds = array<i64: 8, 128>}, {transform_indices = @transform_4, window_bounds = array<i64: 8, 128>}]} {
    %c0 = arith.constant 0 : index
    %c0_0 = arith.constant 0 : index
    %0 = vector.load %arg2[%c0, %c0_0] : memref<128x128xbf16, #tpu.memory_space<vmem>>, vector<128x128xbf16>
    %c0_1 = arith.constant 0 : index
    %c0_2 = arith.constant 0 : index
    %1 = vector.load %arg3[%c0_1, %c0_2] : memref<128x128xbf16, #tpu.memory_space<vmem>>, vector<128x128xbf16>
    %c0_3 = arith.constant 0 : index
    %c0_4 = arith.constant 0 : index
    %2 = vector.load %arg4[%c0_3, %c0_4] : memref<8x128xf32, #tpu.memory_space<vmem>>, vector<8x128xf32>
    %3 = vector.extract_strided_slice %2 {offsets = [0, 0], sizes = [1, 128], strides = [1, 1]} : vector<8x128xf32> to vector<1x128xf32>
    %4 = vector.extract_strided_slice %2 {offsets = [1, 0], sizes = [1, 128], strides = [1, 1]} : vector<8x128xf32> to vector<1x128xf32>
    %5 = vector.extract_strided_slice %2 {offsets = [2, 0], sizes = [1, 128], strides = [1, 1]} : vector<8x128xf32> to vector<1x128xf32>
    %6 = vector.extract_strided_slice %2 {offsets = [3, 0], sizes = [1, 128], strides = [1, 1]} : vector<8x128xf32> to vector<1x128xf32>
    %c0_5 = arith.constant 0 : index
    %c0_6 = arith.constant 0 : index
    %7 = vector.load %arg1[%c0_5, %c0_6] : memref<8x128xbf16, #tpu.memory_space<vmem>>, vector<8x128xbf16>
    %8 = arith.extf %7 : vector<8x128xbf16> to vector<8x128xf32>
    %cst = arith.constant dense<0.000000e+00> : vector<8x128xf32>
    %9 = tpu.matmul %7, %0, %cst {dimension_numbers = #tpu.dot_dimension_numbers<[1], [0], [0], [1], [0, 0, 1, 1], [], []>} : vector<8x128xbf16>, vector<128x128xbf16>, vector<8x128xf32> -> vector<8x128xf32>
    %10 = vector.broadcast %3 : vector<1x128xf32> to vector<8x128xf32>
    %11 = arith.addf %9, %10 : vector<8x128xf32>
    %cst_7 = arith.constant 0.000000e+00 : f32
    %12 = vector.broadcast %cst_7 : f32 to vector<8x128xf32>
    %13 = arith.maximumf %11, %12 : vector<8x128xf32>
    %cst_8 = arith.constant dense<0.000000e+00> : vector<8xf32>
    %14 = vector.multi_reduction <add>, %13, %cst_8 [1] : vector<8x128xf32> to vector<8xf32>
    %15 = vector.shape_cast %14 : vector<8xf32> to vector<8x1xf32>
    %16 = arith.mulf %13, %13 : vector<8x128xf32>
    %cst_9 = arith.constant dense<0.000000e+00> : vector<8xf32>
    %17 = vector.multi_reduction <add>, %16, %cst_9 [1] : vector<8x128xf32> to vector<8xf32>
    %18 = vector.shape_cast %17 : vector<8xf32> to vector<8x1xf32>
    %cst_10 = arith.constant 3.125000e-02 : f32
    %19 = vector.broadcast %cst_10 : f32 to vector<8x1xf32>
    %20 = arith.mulf %15, %19 : vector<8x1xf32>
    %cst_11 = arith.constant 3.125000e-02 : f32
    %21 = vector.broadcast %cst_11 : f32 to vector<8x1xf32>
    %22 = arith.mulf %18, %21 : vector<8x1xf32>
    %23 = arith.mulf %20, %20 : vector<8x1xf32>
    %24 = arith.subf %22, %23 : vector<8x1xf32>
    %cst_12 = arith.constant 0.000000e+00 : f32
    %25 = vector.broadcast %cst_12 : f32 to vector<8x1xf32>
    %26 = arith.maximumf %24, %25 : vector<8x1xf32>
    %27 = vector.broadcast %20 : vector<8x1xf32> to vector<8x128xf32>
    %28 = arith.subf %13, %27 : vector<8x128xf32>
    %cst_13 = arith.constant 9.99999974E-6 : f32
    %29 = vector.broadcast %cst_13 : f32 to vector<8x1xf32>
    %30 = arith.addf %26, %29 : vector<8x1xf32>
    %31 = math.rsqrt %30 : vector<8x1xf32>
    %32 = vector.broadcast %31 : vector<8x1xf32> to vector<8x128xf32>
    %33 = arith.mulf %28, %32 : vector<8x128xf32>
    %34 = arith.truncf %33 : vector<8x128xf32> to vector<8x128xbf16>
    %cst_14 = arith.constant dense<0.000000e+00> : vector<8x128xf32>
    %35 = tpu.matmul %34, %1, %cst_14 {dimension_numbers = #tpu.dot_dimension_numbers<[1], [0], [0], [1], [0, 0, 1, 1], [], []>} : vector<8x128xbf16>, vector<128x128xbf16>, vector<8x128xf32> -> vector<8x128xf32>
    %36 = vector.broadcast %4 : vector<1x128xf32> to vector<8x128xf32>
    %37 = arith.addf %35, %36 : vector<8x128xf32>
    %cst_15 = arith.constant 0.000000e+00 : f32
    %38 = vector.broadcast %cst_15 : f32 to vector<8x128xf32>
    %39 = arith.maximumf %37, %38 : vector<8x128xf32>
    %cst_16 = arith.constant dense<0.000000e+00> : vector<8xf32>
    %40 = vector.multi_reduction <add>, %39, %cst_16 [1] : vector<8x128xf32> to vector<8xf32>
    %41 = vector.shape_cast %40 : vector<8xf32> to vector<8x1xf32>
    %42 = arith.mulf %39, %39 : vector<8x128xf32>
    %cst_17 = arith.constant dense<0.000000e+00> : vector<8xf32>
    %43 = vector.multi_reduction <add>, %42, %cst_17 [1] : vector<8x128xf32> to vector<8xf32>
    %44 = vector.shape_cast %43 : vector<8xf32> to vector<8x1xf32>
    %cst_18 = arith.constant 3.125000e-02 : f32
    %45 = vector.broadcast %cst_18 : f32 to vector<8x1xf32>
    %46 = arith.mulf %41, %45 : vector<8x1xf32>
    %cst_19 = arith.constant 3.125000e-02 : f32
    %47 = vector.broadcast %cst_19 : f32 to vector<8x1xf32>
    %48 = arith.mulf %44, %47 : vector<8x1xf32>
    %49 = arith.mulf %46, %46 : vector<8x1xf32>
    %50 = arith.subf %48, %49 : vector<8x1xf32>
    %cst_20 = arith.constant 0.000000e+00 : f32
    %51 = vector.broadcast %cst_20 : f32 to vector<8x1xf32>
    %52 = arith.maximumf %50, %51 : vector<8x1xf32>
    %53 = vector.broadcast %46 : vector<8x1xf32> to vector<8x128xf32>
    %54 = arith.subf %39, %53 : vector<8x128xf32>
    %cst_21 = arith.constant 9.99999974E-6 : f32
    %55 = vector.broadcast %cst_21 : f32 to vector<8x1xf32>
    %56 = arith.addf %52, %55 : vector<8x1xf32>
    %57 = math.rsqrt %56 : vector<8x1xf32>
    %58 = vector.broadcast %57 : vector<8x1xf32> to vector<8x128xf32>
    %59 = arith.mulf %54, %58 : vector<8x128xf32>
    %60 = vector.broadcast %5 : vector<1x128xf32> to vector<8x128xf32>
    %61 = arith.mulf %59, %60 : vector<8x128xf32>
    %62 = vector.broadcast %6 : vector<1x128xf32> to vector<8x128xf32>
    %63 = arith.addf %61, %62 : vector<8x128xf32>
    %64 = arith.addf %8, %63 : vector<8x128xf32>
    %c0_22 = arith.constant 0 : index
    %c0_23 = arith.constant 0 : index
    %65 = vector.load %arg5[%c0_22, %c0_23] : memref<8x128xf32, #tpu.memory_space<vmem>>, vector<8x128xf32>
    tpu.vector_store %arg5[%c0_22, %c0_23], %64 {strides = array<i32>} : memref<8x128xf32, #tpu.memory_space<vmem>>, vector<8x128xf32>,
    return
  }
  func.func @transform_0(%arg0: i32) -> (i32, i32) {
    %c0_i32 = arith.constant 0 : i32
    %c0_i32_0 = arith.constant 0 : i32
    return %arg0, %c0_i32 : i32, i32
  }
  func.func @transform_1(%arg0: i32) -> (i32, i32) {
    %c0_i32 = arith.constant 0 : i32
    %c0_i32_0 = arith.constant 0 : i32
    %c0_i32_1 = arith.constant 0 : i32
    return %c0_i32, %c0_i32_0 : i32, i32
  }
  func.func @transform_2(%arg0: i32) -> (i32, i32) {
    %c0_i32 = arith.constant 0 : i32
    %c0_i32_0 = arith.constant 0 : i32
    %c0_i32_1 = arith.constant 0 : i32
    return %c0_i32, %c0_i32_0 : i32, i32
  }
  func.func @transform_3(%arg0: i32) -> (i32, i32) {
    %c0_i32 = arith.constant 0 : i32
    %c0_i32_0 = arith.constant 0 : i32
    %c0_i32_1 = arith.constant 0 : i32
    return %c0_i32, %c0_i32_0 : i32, i32
  }
  func.func @transform_4(%arg0: i32) -> (i32, i32) {
    %c0_i32 = arith.constant 0 : i32
    %c0_i32_0 = arith.constant 0 : i32
    return %arg0, %c0_i32 : i32, i32
  }
}

module attributes {stable_mosaic.version = 11 : i64} {
  func.func @resnorm_kernel(%arg0: i32, %arg1: memref<8x128xbf16, #tpu.memory_space<vmem>>, %arg2: memref<128x128xbf16, #tpu.memory_space<vmem>>, %arg3: memref<128x128xbf16, #tpu.memory_space<vmem>>, %arg4: memref<8x128xf32, #tpu.memory_space<vmem>>, %arg5: memref<8x128xf32, #tpu.memory_space<vmem>>) attributes {dimension_semantics = [#tpu.dimension_semantics<parallel>], iteration_bounds = array<i64: 2>, scalar_prefetch = 0 : i64, scratch_operands = 0 : i64, tpu.core_type = #tpu.core_type<tc>, window_params = [{transform_indices = @transform_0, window_bounds = array<i64: 8, 128>}, {pipeline_mode = #tpu.pipeline_mode<synchronous>, transform_indices = @transform_1, window_bounds = array<i64: 128, 128>}, {pipeline_mode = #tpu.pipeline_mode<synchronous>, transform_indices = @transform_2, window_bounds = array<i64: 128, 128>}, {pipeline_mode = #tpu.pipeline_mode<synchronous>, transform_indices = @transform_3, window_bounds = array<i64: 8, 128>}, {transform_indices = @transform_4, window_bounds = array<i64: 8, 128>}]} {
    %c0 = arith.constant 0 : index
    %c0_0 = arith.constant 0 : index
    %0 = vector.load %arg2[%c0, %c0_0] : memref<128x128xbf16, #tpu.memory_space<vmem>>, vector<128x128xbf16>
    %c0_1 = arith.constant 0 : index
    %c0_2 = arith.constant 0 : index
    %1 = vector.load %arg3[%c0_1, %c0_2] : memref<128x128xbf16, #tpu.memory_space<vmem>>, vector<128x128xbf16>
    %c0_3 = arith.constant 0 : index
    %c0_4 = arith.constant 0 : index
    %2 = vector.load %arg4[%c0_3, %c0_4] : memref<8x128xf32, #tpu.memory_space<vmem>>, vector<8x128xf32>
    %3 = vector.extract_strided_slice %2 {offsets = [0, 0], sizes = [1, 128], strides = [1, 1]} : vector<8x128xf32> to vector<1x128xf32>
    %4 = vector.extract_strided_slice %2 {offsets = [1, 0], sizes = [1, 128], strides = [1, 1]} : vector<8x128xf32> to vector<1x128xf32>
    %5 = vector.extract_strided_slice %2 {offsets = [2, 0], sizes = [1, 128], strides = [1, 1]} : vector<8x128xf32> to vector<1x128xf32>
    %6 = vector.extract_strided_slice %2 {offsets = [3, 0], sizes = [1, 128], strides = [1, 1]} : vector<8x128xf32> to vector<1x128xf32>
    %c0_5 = arith.constant 0 : index
    %c0_6 = arith.constant 0 : index
    %7 = vector.load %arg1[%c0_5, %c0_6] : memref<8x128xbf16, #tpu.memory_space<vmem>>, vector<8x128xbf16>
    %8 = arith.extf %7 : vector<8x128xbf16> to vector<8x128xf32>
    %cst = arith.constant dense<0.000000e+00> : vector<8x128xf32>
    %9 = tpu.matmul %7, %0, %cst {dimension_numbers = #tpu.dot_dimension_numbers<[1], [0], [0], [1], [0, 0, 1, 1], [], []>} : vector<8x128xbf16>, vector<128x128xbf16>, vector<8x128xf32> -> vector<8x128xf32>
    %10 = vector.broadcast %3 : vector<1x128xf32> to vector<8x128xf32>
    %11 = arith.addf %9, %10 : vector<8x128xf32>
    %cst_7 = arith.constant 0.000000e+00 : f32
    %12 = vector.broadcast %cst_7 : f32 to vector<8x128xf32>
    %13 = arith.maximumf %11, %12 : vector<8x128xf32>
    %cst_8 = arith.constant dense<0.000000e+00> : vector<8xf32>
    %14 = vector.multi_reduction <add>, %13, %cst_8 [1] : vector<8x128xf32> to vector<8xf32>
    %15 = vector.shape_cast %14 : vector<8xf32> to vector<8x1xf32>
    %16 = arith.mulf %13, %13 : vector<8x128xf32>
    %cst_9 = arith.constant dense<0.000000e+00> : vector<8xf32>
    %17 = vector.multi_reduction <add>, %16, %cst_9 [1] : vector<8x128xf32> to vector<8xf32>
    %18 = vector.shape_cast %17 : vector<8xf32> to vector<8x1xf32>
    %cst_10 = arith.constant 3.125000e-02 : f32
    %19 = vector.broadcast %cst_10 : f32 to vector<8x1xf32>
    %20 = arith.mulf %15, %19 : vector<8x1xf32>
    %cst_11 = arith.constant 3.125000e-02 : f32
    %21 = vector.broadcast %cst_11 : f32 to vector<8x1xf32>
    %22 = arith.mulf %18, %21 : vector<8x1xf32>
    %23 = arith.mulf %20, %20 : vector<8x1xf32>
    %24 = arith.subf %22, %23 : vector<8x1xf32>
    %cst_12 = arith.constant 0.000000e+00 : f32
    %25 = vector.broadcast %cst_12 : f32 to vector<8x1xf32>
    %26 = arith.maximumf %24, %25 : vector<8x1xf32>
    %27 = vector.broadcast %20 : vector<8x1xf32> to vector<8x128xf32>
    %28 = arith.subf %13, %27 : vector<8x128xf32>
    %cst_13 = arith.constant 9.99999974E-6 : f32
    %29 = vector.broadcast %cst_13 : f32 to vector<8x1xf32>
    %30 = arith.addf %26, %29 : vector<8x1xf32>
    %31 = math.rsqrt %30 : vector<8x1xf32>
    %32 = vector.broadcast %31 : vector<8x1xf32> to vector<8x128xf32>
    %33 = arith.mulf %28, %32 : vector<8x128xf32>
    %34 = arith.truncf %33 : vector<8x128xf32> to vector<8x128xbf16>
    %cst_14 = arith.constant dense<0.000000e+00> : vector<8x128xf32>
    %35 = tpu.matmul %34, %1, %cst_14 {dimension_numbers = #tpu.dot_dimension_numbers<[1], [0], [0], [1], [0, 0, 1, 1], [], []>} : vector<8x128xbf16>, vector<128x128xbf16>, vector<8x128xf32> -> vector<8x128xf32>
    %36 = vector.broadcast %4 : vector<1x128xf32> to vector<8x128xf32>
    %37 = arith.addf %35, %36 : vector<8x128xf32>
    %cst_15 = arith.constant 0.000000e+00 : f32
    %38 = vector.broadcast %cst_15 : f32 to vector<8x128xf32>
    %39 = arith.maximumf %37, %38 : vector<8x128xf32>
    %cst_16 = arith.constant dense<0.000000e+00> : vector<8xf32>
    %40 = vector.multi_reduction <add>, %39, %cst_16 [1] : vector<8x128xf32> to vector<8xf32>
    %41 = vector.shape_cast %40 : vector<8xf32> to vector<8x1xf32>
    %42 = arith.mulf %39, %39 : vector<8x128xf32>
    %cst_17 = arith.constant dense<0.000000e+00> : vector<8xf32>
    %43 = vector.multi_reduction <add>, %42, %cst_17 [1] : vector<8x128xf32> to vector<8xf32>
    %44 = vector.shape_cast %43 : vector<8xf32> to vector<8x1xf32>
    %cst_18 = arith.constant 3.125000e-02 : f32
    %45 = vector.broadcast %cst_18 : f32 to vector<8x1xf32>
    %46 = arith.mulf %41, %45 : vector<8x1xf32>
    %cst_19 = arith.constant 3.125000e-02 : f32
    %47 = vector.broadcast %cst_19 : f32 to vector<8x1xf32>
    %48 = arith.mulf %44, %47 : vector<8x1xf32>
    %49 = arith.mulf %46, %46 : vector<8x1xf32>
    %50 = arith.subf %48, %49 : vector<8x1xf32>
    %cst_20 = arith.constant 0.000000e+00 : f32
    %51 = vector.broadcast %cst_20 : f32 to vector<8x1xf32>
    %52 = arith.maximumf %50, %51 : vector<8x1xf32>
    %53 = vector.broadcast %46 : vector<8x1xf32> to vector<8x128xf32>
    %54 = arith.subf %39, %53 : vector<8x128xf32>
    %cst_21 = arith.constant 9.99999974E-6 : f32
    %55 = vector.broadcast %cst_21 : f32 to vector<8x1xf32>
    %56 = arith.addf %52, %55 : vector<8x1xf32>
    %57 = math.rsqrt %56 : vector<8x1xf32>
    %58 = vector.broadcast %57 : vector<8x1xf32> to vector<8x128xf32>
    %59 = arith.mulf %54, %58 : vector<8x128xf32>
    %60 = vector.broadcast %5 : vector<1x128xf32> to vector<8x128xf32>
    %61 = arith.mulf %59, %60 : vector<8x128xf32>
    %62 = vector.broadcast %6 : vector<1x128xf32> to vector<8x128xf32>
    %63 = arith.addf %61, %62 : vector<8x128xf32>
    %64 = arith.addf %8, %63 : vector<8x128xf32>
    %c0_22 = arith.constant 0 : index
    %c0_23 = arith.constant 0 : index
    %65 = vector.load %arg5[%c0_22, %c0_23] : memref<8x128xf32, #tpu.memory_space<vmem>>, vector<8x128xf32>
    tpu.vector_store %arg5[%c0_22, %c0_23], %64 {strides = array<i32>} : memref<8x128xf32, #tpu.memory_space<vmem>>, vector<8x128xf32>,
    return
  }
  func.func @transform_0(%arg0: i32) -> (i32, i32) {
    %c0_i32 = arith.constant 0 : i32
    %c0_i32_0 = arith.constant 0 : i32
    return %arg0, %c0_i32 : i32, i32
  }
  func.func @transform_1(%arg0: i32) -> (i32, i32) {
    %c0_i32 = arith.constant 0 : i32
    %c0_i32_0 = arith.constant 0 : i32
    %c0_i32_1 = arith.constant 0 : i32
    return %c0_i32, %c0_i32_0 : i32, i32
  }
  func.func @transform_2(%arg0: i32) -> (i32, i32) {
    %c0_i32 = arith.constant 0 : i32
    %c0_i32_0 = arith.constant 0 : i32
    %c0_i32_1 = arith.constant 0 : i32
    return %c0_i32, %c0_i32_0 : i32, i32
  }
  func.func @transform_3(%arg0: i32) -> (i32, i32) {
    %c0_i32 = arith.constant 0 : i32
    %c0_i32_0 = arith.constant 0 : i32
    %c0_i32_1 = arith.constant 0 : i32
    return %c0_i32, %c0_i32_0 : i32, i32
  }
  func.func @transform_4(%arg0: i32) -> (i32, i32) {
    %c0_i32 = arith.constant 0 : i32
    %c0_i32_0 = arith.constant 0 : i32
    return %arg0, %c0_i32 : i32, i32
  }
}

</mosaic_0001>

<llo_original>
// kernel: tpu_custom_call.1
$region0: #{tpu_custom_call.1}
  #allocation0 [shape = 'u32[]', space=smem, size = 0x4, offset = 0x4, fixed_abs, tag = 'smem constant byte address 0x4 - core index']
  #allocation1 [shape = 'u32[144,128]{1,0:T(1,128)}', space=vmem, size = 0x12000, scoped, tag = 'internal scratch']
  %s0 = inlined_call_operand.hbm [shape: bf16[16,128], index: 0, kind: input, shape index: {}]
  %s1 = inlined_call_operand.hbm [shape: bf16[128,128], index: 1, kind: input, shape index: {}]
  %s2 = inlined_call_operand.hbm [shape: bf16[128,128], index: 2, kind: input, shape index: {}]
  %s3 = inlined_call_operand.hbm [shape: f32[8,128], index: 3, kind: input, shape index: {}]
  %s4 = inlined_call_operand.hbm [shape: f32[16,128], index: 4, kind: output, shape index: {}]
  %s5 = sld [smem:[#allocation0]]
  $region65: #{tpu_custom_call.1} parent=0
    _
  %s7 = ssub.s32 1, %s5
  %s8 = scalar_select 0, %s7, %s5
  $region1: #{tpu_custom_call.1} parent=0
    #allocation2 [shape = 'u8[4096]{0}', space=vmem, size = 0x1000, scoped, tag = 'input window, operand 0']
    #allocation3 [shape = 's32[2]{0}', space=sflag, size = 0x8, scoped, tag = 'scoped memory for tpu_custom_call.1']
    #allocation4 [shape = 's32[2]{0}', space=sflag, size = 0x8, scoped, tag = 'scoped memory for tpu_custom_call.1']
    #allocation5 [shape = 'u8[32768]{0}', space=vmem, size = 0x8000, scoped, tag = 'input window, operand 1, single buffered']
    #allocation6 [shape = 's32[1]{0}', space=sflag, size = 0x4, scoped, tag = 'scoped memory for tpu_custom_call.1']
    #allocation7 [shape = 'u8[32768]{0}', space=vmem, size = 0x8000, scoped, tag = 'input window, operand 2, single buffered']
    #allocation8 [shape = 'u8[4096]{0}', space=vmem, size = 0x1000, scoped, tag = 'input window, operand 3, single buffered']
    #allocation9 [shape = 's32[1]{0}', space=sflag, size = 0x4, scoped, tag = 'scoped memory for tpu_custom_call.1']
    #allocation10 [shape = 'u8[8192]{0}', space=vmem, size = 0x2000, scoped, tag = 'output window, operand 0']
    %9 = vsyncpa [#allocation3], 0
    %s10 = scalar_lea.sflag [#allocation3], 1
    %11 = vsyncpa %s10, 0
    %12 = vsyncpa [#allocation6], 0
    %13 = vsyncpa [#allocation9], 0
    %14 = vsyncpa [#allocation4], 0
    %s15 = scalar_lea.sflag [#allocation4], 1
    %16 = vsyncpa %s15, 0
    loop: start=0, step=1, limit=4
    $region2: #{tpu_custom_call.1} parent=1 // loop_pre_header
      _
    $region3: #{tpu_custom_call.1} parent=1 // loop_header
      %s18 = sphi 0, %s22
      %p19 = scmp.ge.s32.totalorder %s18, 4
      %s28 = sphi 0, %s30
      %s31 = sphi 0, %s28
      %s32 = sphi 0, %s31
      %s48 = sphi 0, %s32
      %s52 = sphi 0, %s52
      %s54 = sphi 0, %s52
      %s55 = sphi 0, %s54
      %s69 = sphi 0, %s55
      %s73 = sphi 0, %s73
      %s75 = sphi 0, %s73
      %s76 = sphi 0, %s75
      %s90 = sphi 0, %s76
      %s94 = sphi 0, %s94
      %s96 = sphi 0, %s94
      %s97 = sphi 0, %s96
      %s111 = sphi 0, %s97
      %s117 = sphi 0, %s119
      %s120 = sphi 0, %s117
      %s121 = sphi 0, %s120
      %s137 = sphi 0, %s121
    $region4: #{tpu_custom_call.1} parent=1 // loop_header_branch
      %21 = sbr.rel (%p19) target = $region8
    $region5: #{tpu_custom_call.1} parent=1 // loop_body
      %s23 = ssub.s32 %s18, 1
      %s24 = ssub.s32 %s18, 2
      %s25 = sadd.s32 %s18, 1
      %s26 = ssub.s32 %s18, %s25
      %p27 = scmp.eq.s32.totalorder %s26, 0
      %s29 = sadd.s32 %s28, 1
      %s30 = scalar_select %p27, %s28, %s29
      %p33 = pneg %p27
      %p34 = scmp.eq.s32.totalorder %s18, 1
      %p35 = por %p33, %p34
      %p36 = scmp.ne.s32.totalorder %s28, %s31
      %p37 = scmp.eq.s32.totalorder %s18, 0
      %p38 = por %p36, %p37
      %p39 = scmp.ne.s32.totalorder %s28, %s31
      %p40 = scmp.eq.s32.totalorder %s23, 1
      %p41 = por %p39, %p40
      %p42 = scmp.ne.s32.totalorder %s31, %s32
      %p43 = scmp.eq.s32.totalorder %s23, 0
      %p44 = por %p42, %p43
      %p45 = scmp.ne.s32.totalorder %s31, %s32
      %p46 = scmp.eq.s32.totalorder %s24, 1
      %p47 = por %p45, %p46
      %p49 = scmp.ne.s32.totalorder %s32, %s48
      %p50 = scmp.eq.s32.totalorder %s24, 0
      %p51 = por %p49, %p50
      %s53 = sadd.s32 %s52, 1
      %p56 = scmp.eq.s32.totalorder %s18, 1
      %p57 = scmp.ne.s32.totalorder %s52, %s54
      %p58 = scmp.eq.s32.totalorder %s18, 0
      %p59 = por %p57, %p58
      %p60 = scmp.ne.s32.totalorder %s52, %s54
      %p61 = scmp.eq.s32.totalorder %s23, 1
      %p62 = por %p60, %p61
      %p63 = scmp.ne.s32.totalorder %s54, %s55
      %p64 = scmp.eq.s32.totalorder %s23, 0
      %p65 = por %p63, %p64
      %p66 = scmp.ne.s32.totalorder %s54, %s55
      %p67 = scmp.eq.s32.totalorder %s24, 1
      %p68 = por %p66, %p67
      %p70 = scmp.ne.s32.totalorder %s55, %s69
      %p71 = scmp.eq.s32.totalorder %s24, 0
      %p72 = por %p70, %p71
      %s74 = sadd.s32 %s73, 1
      %p77 = scmp.eq.s32.totalorder %s18, 1
      %p78 = scmp.ne.s32.totalorder %s73, %s75
      %p79 = scmp.eq.s32.totalorder %s18, 0
      %p80 = por %p78, %p79
      %p81 = scmp.ne.s32.totalorder %s73, %s75
      %p82 = scmp.eq.s32.totalorder %s23, 1
      %p83 = por %p81, %p82
      %p84 = scmp.ne.s32.totalorder %s75, %s76
      %p85 = scmp.eq.s32.totalorder %s23, 0
      %p86 = por %p84, %p85
      %p87 = scmp.ne.s32.totalorder %s75, %s76
      %p88 = scmp.eq.s32.totalorder %s24, 1
      %p89 = por %p87, %p88
      %p91 = scmp.ne.s32.totalorder %s76, %s90
      %p92 = scmp.eq.s32.totalorder %s24, 0
      %p93 = por %p91, %p92
      %s95 = sadd.s32 %s94, 1
      %p98 = scmp.eq.s32.totalorder %s18, 1
      %p99 = scmp.ne.s32.totalorder %s94, %s96
      %p100 = scmp.eq.s32.totalorder %s18, 0
      %p101 = por %p99, %p100
      %p102 = scmp.ne.s32.totalorder %s94, %s96
      %p103 = scmp.eq.s32.totalorder %s23, 1
      %p104 = por %p102, %p103
      %p105 = scmp.ne.s32.totalorder %s96, %s97
      %p106 = scmp.eq.s32.totalorder %s23, 0
      %p107 = por %p105, %p106
      %p108 = scmp.ne.s32.totalorder %s96, %s97
      %p109 = scmp.eq.s32.totalorder %s24, 1
      %p110 = por %p108, %p109
      %p112 = scmp.ne.s32.totalorder %s97, %s111
      %p113 = scmp.eq.s32.totalorder %s24, 0
      %p114 = por %p112, %p113
      %s115 = ssub.s32 %s18, %s25
      %p116 = scmp.eq.s32.totalorder %s115, 0
      %s118 = sadd.s32 %s117, 1
      %s119 = scalar_select %p116, %s117, %s118
      %p122 = pneg %p116
      %p123 = scmp.eq.s32.totalorder %s18, 1
      %p124 = por %p122, %p123
      %p125 = scmp.ne.s32.totalorder %s117, %s120
      %p126 = scmp.eq.s32.totalorder %s18, 0
      %p127 = por %p125, %p126
      %p128 = scmp.ne.s32.totalorder %s117, %s120
      %p129 = scmp.eq.s32.totalorder %s23, 1
      %p130 = por %p128, %p129
      %p131 = scmp.ne.s32.totalorder %s120, %s121
      %p132 = scmp.eq.s32.totalorder %s23, 0
      %p133 = por %p131, %p132
      %p134 = scmp.ne.s32.totalorder %s120, %s121
      %p135 = scmp.eq.s32.totalorder %s24, 1
      %p136 = por %p134, %p135
      %p138 = scmp.ne.s32.totalorder %s121, %s137
      %p139 = scmp.eq.s32.totalorder %s24, 0
      %p140 = por %p138, %p139
      %p141 = scmp.le.s32.totalorder 1, %s18
      %p142 = scmp.lt.s32.totalorder %s18, 3
      %p143 = pnand %p141, %p142
      %p144 = pneg %p143
      // Predicated region
      $region9: #{tpu_custom_call.1} parent=5 // pred_check
        _
      $region10: #{tpu_custom_call.1} parent=5 // pred_check_branch
        %146 = sbr.rel (%p143) target = $region12
      $region11: #{tpu_custom_call.1} parent=5 // pred_region
        %s147 = ssub.s32 %s18, 1
        // Predicated region
        $region13: #{tpu_custom_call.1} parent=11 // pred_check
          %p148 = pneg %p65
        $region14: #{tpu_custom_call.1} parent=11 // pred_check_branch
          %150 = sbr.rel (%p148) target = $region16
        $region15: #{tpu_custom_call.1} parent=11 // pred_region
          %s152 = ssub.s32 1024, 1024
          %153 = vsyncadd [#allocation6], %s152
          %s154 = sshll.u32 [#allocation5], 4
          %s155 = int_to_ptr.vmem [resolvable:$true] %s154
          %160 = dma.hbm_to_vmem [thread:$0]  %s1, 1024, %s155, [#allocation6], 64, 64, 4
        $region16: #{tpu_custom_call.1} parent=11 // pred_fallthru
          _
        // Predicated region
        $region17: #{tpu_custom_call.1} parent=11 // pred_check
          %p161 = pneg %p86
        $region18: #{tpu_custom_call.1} parent=11 // pred_check_branch
          %163 = sbr.rel (%p161) target = $region20
        $region19: #{tpu_custom_call.1} parent=11 // pred_region
          %s165 = ssub.s32 1024, 1024
          %166 = vsyncadd [#allocation6], %s165
          %s167 = sshll.u32 [#allocation7], 4
          %s168 = int_to_ptr.vmem [resolvable:$true] %s167
          %173 = dma.hbm_to_vmem [thread:$0]  %s2, 1024, %s168, [#allocation6], 64, 64, 4
        $region20: #{tpu_custom_call.1} parent=11 // pred_fallthru
          _
        // Predicated region
        $region21: #{tpu_custom_call.1} parent=11 // pred_check
          %p174 = pneg %p107
        $region22: #{tpu_custom_call.1} parent=11 // pred_check_branch
          %176 = sbr.rel (%p174) target = $region24
        $region23: #{tpu_custom_call.1} parent=11 // pred_region
          %s178 = ssub.s32 128, 128
          %179 = vsyncadd [#allocation9], %s178
          %s181 = sshll.u32 [#allocation8], 4
          %s182 = int_to_ptr.vmem [resolvable:$true] %s181
          %184 = dma.hbm_to_vmem [thread:$0]  %s3, 128, %s182, [#allocation9]
        $region24: #{tpu_custom_call.1} parent=11 // pred_fallthru
          _
      $region12: #{tpu_custom_call.1} parent=5 // pred_fallthru
        _
      %p185 = scmp.lt.s32.totalorder %s18, 2
      // Predicated region
      $region25: #{tpu_custom_call.1} parent=5 // pred_check
        %p186 = pneg %p185
      $region26: #{tpu_custom_call.1} parent=5 // pred_check_branch
        %188 = sbr.rel (%p186) target = $region28
      $region27: #{tpu_custom_call.1} parent=5 // pred_region
        // Predicated region
        $region29: #{tpu_custom_call.1} parent=27 // pred_check
          %p189 = pneg %p38
        $region30: #{tpu_custom_call.1} parent=27 // pred_check_branch
          %191 = sbr.rel (%p189) target = $region32
        $region31: #{tpu_custom_call.1} parent=27 // pred_region
          %s192 = sand.u32 %s28, 1
          %s193 = scalar_lea.sflag [#allocation3], %s192
          %s194 = sand.u32 %s28, 1
          %s195 = smul.addr %s194, 4
          %s196 = scalar_lea.vmem [#allocation2], %s195
          %s198 = ssub.s32 64, 64
          %199 = vsyncadd %s193, %s198
          %s200 = smul.addr %s18, 64
          %s201 = scalar_lea.hbm %s0, %s200
          %s203 = sshll.u32 %s196, 4
          %s204 = int_to_ptr.vmem [resolvable:$true] %s203
          %206 = dma.hbm_to_vmem [thread:$0]  %s201, 64, %s204, %s193
        $region32: #{tpu_custom_call.1} parent=27 // pred_fallthru
          _
      $region28: #{tpu_custom_call.1} parent=5 // pred_fallthru
        _
      %p207 = scmp.le.s32.totalorder 1, %s18
      %p208 = scmp.lt.s32.totalorder %s18, 3
      %p209 = pnand %p207, %p208
      %p210 = pneg %p209
      // Predicated region
      $region33: #{tpu_custom_call.1} parent=5 // pred_check
        _
      $region34: #{tpu_custom_call.1} parent=5 // pred_check_branch
        %212 = sbr.rel (%p209) target = $region36
      $region35: #{tpu_custom_call.1} parent=5 // pred_region
        %s213 = ssub.s32 %s18, 1
        %s214 = sand.u32 %s31, 1
        %s215 = scalar_lea.sflag [#allocation3], %s214
        %s216 = sand.u32 %s31, 1
        %s217 = smul.addr %s216, 4
        %s218 = scalar_lea.vmem [#allocation2], %s217
        // Predicated region
        $region37: #{tpu_custom_call.1} parent=35 // pred_check
          %p219 = pneg %p44
        $region38: #{tpu_custom_call.1} parent=35 // pred_check_branch
          %221 = sbr.rel (%p219) target = $region40
        $region39: #{tpu_custom_call.1} parent=35 // pred_region
          %222 = dma.done %s215, 64
        $region40: #{tpu_custom_call.1} parent=35 // pred_fallthru
          _
        // Predicated region
        $region41: #{tpu_custom_call.1} parent=35 // pred_check
          %p223 = pneg %p65
        $region42: #{tpu_custom_call.1} parent=35 // pred_check_branch
          %225 = sbr.rel (%p223) target = $region44
        $region43: #{tpu_custom_call.1} parent=35 // pred_region
          %226 = dma.done [#allocation6], 1024
        $region44: #{tpu_custom_call.1} parent=35 // pred_fallthru
          _
        // Predicated region
        $region45: #{tpu_custom_call.1} parent=35 // pred_check
          %p227 = pneg %p86
        $region46: #{tpu_custom_call.1} parent=35 // pred_check_branch
          %229 = sbr.rel (%p227) target = $region48
        $region47: #{tpu_custom_call.1} parent=35 // pred_region
          %230 = dma.done [#allocation6], 1024
        $region48: #{tpu_custom_call.1} parent=35 // pred_fallthru
          _
        // Predicated region
        $region49: #{tpu_custom_call.1} parent=35 // pred_check
          %p231 = pneg %p107
        $region50: #{tpu_custom_call.1} parent=35 // pred_check_branch
          %233 = sbr.rel (%p231) target = $region52
        $region51: #{tpu_custom_call.1} parent=35 // pred_region
          %234 = dma.done [#allocation9], 128
        $region52: #{tpu_custom_call.1} parent=35 // pred_fallthru
          _
        %s235 = sand.u32 %s31, 1
        %s236 = scalar_lea.sflag [#allocation3], %s235
        %s237 = sand.u32 %s31, 1
        %s238 = smul.addr %s237, 4
        %s239 = scalar_lea.vmem [#allocation2], %s238
        %p240 = pneg %p44
        %p241 = pneg %p41
        %p242 = pneg %p65
        %p243 = pneg %p62
        %p244 = pneg %p86
        %p245 = pneg %p83
        %p246 = pneg %p107
        %p247 = pneg %p104
        %p248 = pneg %p133
        %p249 = pneg %p130
        %s250 = sand.u32 %s120, 1
        %s251 = scalar_lea.sflag [#allocation4], %s250
        %s252 = sand.u32 %s120, 1
        %s253 = smul.addr %s252, 8
        %s254 = scalar_lea.vmem [#allocation10], %s253
        %v256 = vld [vmem:[#allocation5] sm:$0xf]
        %v257 = vld [vmem:[#allocation5 + $0x4] sm:$0xf]
        %v258 = vld [vmem:[#allocation5 + $0x8] sm:$0xf]
        %v259 = vld [vmem:[#allocation5 + $0xc] sm:$0xf]
        %v260 = vld [vmem:[#allocation5 + $0x10] sm:$0xf]
        %v261 = vld [vmem:[#allocation5 + $0x14] sm:$0xf]
        %v262 = vld [vmem:[#allocation5 + $0x18] sm:$0xf]
        %v263 = vld [vmem:[#allocation5 + $0x1c] sm:$0xf]
        %v264 = vld [vmem:[#allocation5 + $0x20] sm:$0xf]
        %v265 = vld [vmem:[#allocation5 + $0x24] sm:$0xf]
        %v266 = vld [vmem:[#allocation5 + $0x28] sm:$0xf]
        %v267 = vld [vmem:[#allocation5 + $0x2c] sm:$0xf]
        %v268 = vld [vmem:[#allocation5 + $0x30] sm:$0xf]
        %v269 = vld [vmem:[#allocation5 + $0x34] sm:$0xf]
        %v270 = vld [vmem:[#allocation5 + $0x38] sm:$0xf]
        %v271 = vld [vmem:[#allocation5 + $0x3c] sm:$0xf]
        %v272 = vld [vmem:[#allocation7] sm:$0xf]
        %v273 = vld [vmem:[#allocation7 + $0x4] sm:$0xf]
        %v274 = vld [vmem:[#allocation7 + $0x8] sm:$0xf]
        %v275 = vld [vmem:[#allocation7 + $0xc] sm:$0xf]
        %v276 = vld [vmem:[#allocation7 + $0x10] sm:$0xf]
        %v277 = vld [vmem:[#allocation7 + $0x14] sm:$0xf]
        %v278 = vld [vmem:[#allocation7 + $0x18] sm:$0xf]
        %v279 = vld [vmem:[#allocation7 + $0x1c] sm:$0xf]
        %v280 = vld [vmem:[#allocation7 + $0x20] sm:$0xf]
        %v281 = vld [vmem:[#allocation7 + $0x24] sm:$0xf]
        %v282 = vld [vmem:[#allocation7 + $0x28] sm:$0xf]
        %v283 = vld [vmem:[#allocation7 + $0x2c] sm:$0xf]
        %v284 = vld [vmem:[#allocation7 + $0x30] sm:$0xf]
        %v285 = vld [vmem:[#allocation7 + $0x34] sm:$0xf]
        %v286 = vld [vmem:[#allocation7 + $0x38] sm:$0xf]
        %v287 = vld [vmem:[#allocation7 + $0x3c] sm:$0xf]
        %v288 = vld [vmem:[#allocation8] sm:$0xff]
        %v289 = vld [vmem:[%s218] sm:$0xf]
        %v290 = vunpack.c.l.bf16 %v289
        %v291 = vlaneseq
        %v292 = vshrl.u32 %v291, 7
        %v293 = vsub.s32 0, %v292
        %v294 = vrot.slane %v288, %v293
        %v311 = vunpack.c.l.b16 %v256
        %v312 = vunpack.c.l.b16 %v257
        %v313 = vunpack.c.l.b16 %v258
        %v314 = vunpack.c.l.b16 %v259
        %v315 = vunpack.c.l.b16 %v260
        %v316 = vunpack.c.l.b16 %v261
        %v317 = vunpack.c.l.b16 %v262
        %v318 = vunpack.c.l.b16 %v263
        %v319 = vunpack.c.l.b16 %v264
        %v320 = vunpack.c.l.b16 %v265
        %v321 = vunpack.c.l.b16 %v266
        %v322 = vunpack.c.l.b16 %v267
        %v323 = vunpack.c.l.b16 %v268
        %v324 = vunpack.c.l.b16 %v269
        %v325 = vunpack.c.l.b16 %v270
        %v326 = vunpack.c.l.b16 %v271
        %v327 = vpack.c.b16 %v312, %v311
        %v328 = vpack.c.b16 %v314, %v313
        %v329 = vpack.c.b16 %v316, %v315
        %v330 = vpack.c.b16 %v318, %v317
        %v331 = vpack.c.b16 %v320, %v319
        %v332 = vpack.c.b16 %v322, %v321
        %v333 = vpack.c.b16 %v324, %v323
        %v334 = vpack.c.b16 %v326, %v325
        %343 = vmatprep.subr.bf16.mxu0 0
        %344 = vmatpush1.bf16.msra.mxu0 %v334
        %345 = vmatprep.subr.bf16.mxu0 0
        %346 = vmatpush1.bf16.msra.mxu0 %v333
        %347 = vmatprep.subr.bf16.mxu0 0
        %348 = vmatpush1.bf16.msra.mxu0 %v332
        %349 = vmatprep.subr.bf16.mxu0 0
        %350 = vmatpush1.bf16.msra.mxu0 %v331
        %351 = vmatprep.subr.bf16.mxu0 0
        %352 = vmatpush1.bf16.msra.mxu0 %v330
        %353 = vmatprep.subr.bf16.mxu0 0
        %354 = vmatpush1.bf16.msra.mxu0 %v329
        %355 = vmatprep.subr.bf16.mxu0 0
        %356 = vmatpush1.bf16.msra.mxu0 %v328
        %357 = vmatprep.subr.bf16.mxu0 0
        %358 = vmatpush1.bf16.msra.mxu0 %v327
        %359 = vmatprep.subr.bf16.mxu0 0
        %360 = vmatpush2.bf16.msra.mxu0 0
        %361 = vmatprep.subr.bf16.mxu0 0
        %362 = vmatpush2.bf16.msra.mxu0 0
        %363 = vmatprep.subr.bf16.mxu0 0
        %364 = vmatpush2.bf16.msra.mxu0 0
        %365 = vmatprep.subr.bf16.mxu0 0
        %366 = vmatpush2.bf16.msra.mxu0 0
        %367 = vmatprep.subr.bf16.mxu0 0
        %368 = vmatpush2.bf16.msra.mxu0 0
        %369 = vmatprep.subr.bf16.mxu0 0
        %370 = vmatpush2.bf16.msra.mxu0 0
        %371 = vmatprep.subr.bf16.mxu0 0
        %372 = vmatpush2.bf16.msra.mxu0 0
        %373 = vmatprep.subr.bf16.mxu0 0
        %374 = vmatpush2.bf16.msra.mxu0 0
        %375 = vmatprep.mubr.bf16.mxu0 0
        %376 = vmatmul.mubr.bf16.gmra.mxu0 %v289
        %v377 = vpop.f32.mrf.mxu0
        %v378 = vadd.f32 %v294, %v377
        %v379 = vpop.f32.mrf.mxu0
        %v380 = vpop.f32.mrf.mxu0
        %v381 = vpop.f32.mrf.mxu0
        %382 = vdwg.mxu0
        %v383 = vmax.f32 %v378, 0.0
        %384 = vadd.xlane.f32.xlu0 %v383
        %v385 = vpop.xlane.xlu0 %384
        %v386 = vmul.f32 %v383, %v383
        %387 = vadd.xlane.f32.xlu0 %v386
        %v388 = vpop.xlane.xlu0 %387
        %v389 = vmul.f32 %v385, 0.03125
        %v390 = vmul.f32 %v388, 0.03125
        %v391 = vmul.f32 %v389, %v389
        %v392 = vsub.f32 %v390, %v391
        %v393 = vmax.f32 %v392, 0.0
        %v394 = vsub.f32 %v383, %v389
        %v395 = vadd.f32 %v393, 1e-05
        %v396 = vrsqrt.pop %v395
        %v397 = vmul.f32 %v394, %v396
        %v398 = vpack.c.bf16 %v397, %v397
        %v399 = vlaneseq
        %v400 = vshrl.u32 %v399, 7
        %v401 = vsub.s32 1, %v400
        %v402 = vrot.slane %v288, %v401
        %v419 = vunpack.c.l.b16 %v272
        %v420 = vunpack.c.l.b16 %v273
        %v421 = vunpack.c.l.b16 %v274
        %v422 = vunpack.c.l.b16 %v275
        %v423 = vunpack.c.l.b16 %v276
        %v424 = vunpack.c.l.b16 %v277
        %v425 = vunpack.c.l.b16 %v278
        %v426 = vunpack.c.l.b16 %v279
        %v427 = vunpack.c.l.b16 %v280
        %v428 = vunpack.c.l.b16 %v281
        %v429 = vunpack.c.l.b16 %v282
        %v430 = vunpack.c.l.b16 %v283
        %v431 = vunpack.c.l.b16 %v284
        %v432 = vunpack.c.l.b16 %v285
        %v433 = vunpack.c.l.b16 %v286
        %v434 = vunpack.c.l.b16 %v287
        %v435 = vpack.c.b16 %v420, %v419
        %v436 = vpack.c.b16 %v422, %v421
        %v437 = vpack.c.b16 %v424, %v423
        %v438 = vpack.c.b16 %v426, %v425
        %v439 = vpack.c.b16 %v428, %v427
        %v440 = vpack.c.b16 %v430, %v429
        %v441 = vpack.c.b16 %v432, %v431
        %v442 = vpack.c.b16 %v434, %v433
        %451 = vmatprep.subr.bf16.mxu0 0
        %452 = vmatpush1.bf16.msra.mxu0 %v442
        %453 = vmatprep.subr.bf16.mxu0 0
        %454 = vmatpush1.bf16.msra.mxu0 %v441
        %455 = vmatprep.subr.bf16.mxu0 0
        %456 = vmatpush1.bf16.msra.mxu0 %v440
        %457 = vmatprep.subr.bf16.mxu0 0
        %458 = vmatpush1.bf16.msra.mxu0 %v439
        %459 = vmatprep.subr.bf16.mxu0 0
        %460 = vmatpush1.bf16.msra.mxu0 %v438
        %461 = vmatprep.subr.bf16.mxu0 0
        %462 = vmatpush1.bf16.msra.mxu0 %v437
        %463 = vmatprep.subr.bf16.mxu0 0
        %464 = vmatpush1.bf16.msra.mxu0 %v436
        %465 = vmatprep.subr.bf16.mxu0 0
        %466 = vmatpush1.bf16.msra.mxu0 %v435
        %467 = vmatprep.subr.bf16.mxu0 0
        %468 = vmatpush2.bf16.msra.mxu0 0
        %469 = vmatprep.subr.bf16.mxu0 0
        %470 = vmatpush2.bf16.msra.mxu0 0
        %471 = vmatprep.subr.bf16.mxu0 0
        %472 = vmatpush2.bf16.msra.mxu0 0
        %473 = vmatprep.subr.bf16.mxu0 0
        %474 = vmatpush2.bf16.msra.mxu0 0
        %475 = vmatprep.subr.bf16.mxu0 0
        %476 = vmatpush2.bf16.msra.mxu0 0
        %477 = vmatprep.subr.bf16.mxu0 0
        %478 = vmatpush2.bf16.msra.mxu0 0
        %479 = vmatprep.subr.bf16.mxu0 0
        %480 = vmatpush2.bf16.msra.mxu0 0
        %481 = vmatprep.subr.bf16.mxu0 0
        %482 = vmatpush2.bf16.msra.mxu0 0
        %483 = vmatprep.mubr.bf16.mxu0 0
        %484 = vmatmul.mubr.bf16.gmra.mxu0 %v398
        %v485 = vpop.f32.mrf.mxu0
        %v486 = vadd.f32 %v402, %v485
        %v487 = vpop.f32.mrf.mxu0
        %v488 = vpop.f32.mrf.mxu0
        %v489 = vpop.f32.mrf.mxu0
        %490 = vdwg.mxu0
        %v491 = vmax.f32 %v486, 0.0
        %492 = vadd.xlane.f32.xlu0 %v491
        %v493 = vpop.xlane.xlu0 %492
        %v494 = vmul.f32 %v491, %v491
        %495 = vadd.xlane.f32.xlu0 %v494
        %v496 = vpop.xlane.xlu0 %495
        %v497 = vmul.f32 %v493, 0.03125
        %v498 = vmul.f32 %v496, 0.03125
        %v499 = vmul.f32 %v497, %v497
        %v500 = vsub.f32 %v498, %v499
        %v501 = vmax.f32 %v500, 0.0
        %v502 = vsub.f32 %v491, %v497
        %v503 = vadd.f32 %v501, 1e-05
        %v504 = vrsqrt.pop %v503
        %v505 = vmul.f32 %v502, %v504
        %v506 = vlaneseq
        %v507 = vshrl.u32 %v506, 7
        %v508 = vsub.s32 2, %v507
        %v509 = vrot.slane %v288, %v508
        %v510 = vmul.f32 %v505, %v509
        %v511 = vlaneseq
        %v512 = vshrl.u32 %v511, 7
        %v513 = vsub.s32 3, %v512
        %v514 = vrot.slane %v288, %v513
        %v515 = vadd.f32 %v510, %v514
        %v516 = vadd.f32 %v290, %v515
        %517 = vst [vmem:[%s254] sm:$0xff] %v516
        %s518 = sand.u32 %s120, 1
        %s519 = scalar_lea.sflag [#allocation4], %s518
        %s520 = sand.u32 %s120, 1
        %s521 = smul.addr %s520, 8
        %s522 = scalar_lea.vmem [#allocation10], %s521
        // Predicated region
        $region53: #{tpu_custom_call.1} parent=35 // pred_check
          %p523 = pneg %p130
        $region54: #{tpu_custom_call.1} parent=35 // pred_check_branch
          %525 = sbr.rel (%p523) target = $region56
        $region55: #{tpu_custom_call.1} parent=35 // pred_region
          %s527 = ssub.s32 128, 128
          %528 = vsyncadd %s519, %s527
          %s529 = smul.addr %s23, 128
          %s530 = scalar_lea.hbm %s4, %s529
          %s532 = sshll.u32 %s522, 4
          %s533 = int_to_ptr.vmem [resolvable:$true] %s532
          %535 = dma.vmem_to_hbm [thread:$0]  %s533, 128, %s530, %s519
        $region56: #{tpu_custom_call.1} parent=35 // pred_fallthru
          _
      $region36: #{tpu_custom_call.1} parent=5 // pred_fallthru
        _
      %p536 = scmp.le.s32.totalorder 2, %s18
      // Predicated region
      $region57: #{tpu_custom_call.1} parent=5 // pred_check
        %p537 = pneg %p536
      $region58: #{tpu_custom_call.1} parent=5 // pred_check_branch
        %539 = sbr.rel (%p537) target = $region60
      $region59: #{tpu_custom_call.1} parent=5 // pred_region
        %s540 = ssub.s32 %s18, 2
        // Predicated region
        $region61: #{tpu_custom_call.1} parent=59 // pred_check
          %p541 = pneg %p136
        $region62: #{tpu_custom_call.1} parent=59 // pred_check_branch
          %543 = sbr.rel (%p541) target = $region64
        $region63: #{tpu_custom_call.1} parent=59 // pred_region
          %s544 = sand.u32 %s121, 1
          %s545 = scalar_lea.sflag [#allocation4], %s544
          %s546 = sand.u32 %s121, 1
          %s547 = smul.addr %s546, 8
          %s548 = scalar_lea.vmem [#allocation10], %s547
          %549 = dma.done %s545, 128
        $region64: #{tpu_custom_call.1} parent=59 // pred_fallthru
          _
      $region60: #{tpu_custom_call.1} parent=5 // pred_fallthru
        _
    $region6: #{tpu_custom_call.1} parent=1 // loop_footer
      %s22 = sadd.s32 1, %s18
    $region7: #{tpu_custom_call.1} parent=1 // loop_footer_branch
      %17 = sbr.rel target = $region3
    $region8: #{tpu_custom_call.1} parent=1 // loop_exit
      _
    %550 = vsyncpa [#allocation3], 1
    %s551 = scalar_lea.sflag [#allocation3], 1
    %552 = vsyncpa %s551, 1
    %553 = vsyncpa [#allocation6], 1
    %554 = vsyncpa [#allocation9], 1
    %555 = vsyncpa [#allocation4], 1
    %s556 = scalar_lea.sflag [#allocation4], 1
    %557 = vsyncpa %s556, 1

// kernel: tpu_custom_call.1
$region0: #{tpu_custom_call.1}
  #allocation0 [shape = 'u32[]', space=smem, size = 0x4, offset = 0x4, fixed_abs, tag = 'smem constant byte address 0x4 - core index']
  #allocation1 [shape = 'u32[144,128]{1,0:T(1,128)}', space=vmem, size = 0x12000, scoped, tag = 'internal scratch']
  %s0 = inlined_call_operand.hbm [shape: bf16[16,128], index: 0, kind: input, shape index: {}]
  %s1 = inlined_call_operand.hbm [shape: bf16[128,128], index: 1, kind: input, shape index: {}]
  %s2 = inlined_call_operand.hbm [shape: bf16[128,128], index: 2, kind: input, shape index: {}]
  %s3 = inlined_call_operand.hbm [shape: f32[8,128], index: 3, kind: input, shape index: {}]
  %s4 = inlined_call_operand.hbm [shape: f32[16,128], index: 4, kind: output, shape index: {}]
  %s5 = sld [smem:[#allocation0]]
  $region65: #{tpu_custom_call.1} parent=0
    _
  %s7 = ssub.s32 1, %s5
  %s8 = scalar_select 0, %s7, %s5
  $region1: #{tpu_custom_call.1} parent=0
    #allocation2 [shape = 'u8[4096]{0}', space=vmem, size = 0x1000, scoped, tag = 'input window, operand 0']
    #allocation3 [shape = 's32[2]{0}', space=sflag, size = 0x8, scoped, tag = 'scoped memory for tpu_custom_call.1']
    #allocation4 [shape = 's32[2]{0}', space=sflag, size = 0x8, scoped, tag = 'scoped memory for tpu_custom_call.1']
    #allocation5 [shape = 'u8[32768]{0}', space=vmem, size = 0x8000, scoped, tag = 'input window, operand 1, single buffered']
    #allocation6 [shape = 's32[1]{0}', space=sflag, size = 0x4, scoped, tag = 'scoped memory for tpu_custom_call.1']
    #allocation7 [shape = 'u8[32768]{0}', space=vmem, size = 0x8000, scoped, tag = 'input window, operand 2, single buffered']
    #allocation8 [shape = 'u8[4096]{0}', space=vmem, size = 0x1000, scoped, tag = 'input window, operand 3, single buffered']
    #allocation9 [shape = 's32[1]{0}', space=sflag, size = 0x4, scoped, tag = 'scoped memory for tpu_custom_call.1']
    #allocation10 [shape = 'u8[8192]{0}', space=vmem, size = 0x2000, scoped, tag = 'output window, operand 0']
    %9 = vsyncpa [#allocation3], 0
    %s10 = scalar_lea.sflag [#allocation3], 1
    %11 = vsyncpa %s10, 0
    %12 = vsyncpa [#allocation6], 0
    %13 = vsyncpa [#allocation9], 0
    %14 = vsyncpa [#allocation4], 0
    %s15 = scalar_lea.sflag [#allocation4], 1
    %16 = vsyncpa %s15, 0
    loop: start=0, step=1, limit=4
    $region2: #{tpu_custom_call.1} parent=1 // loop_pre_header
      _
    $region3: #{tpu_custom_call.1} parent=1 // loop_header
      %s18 = sphi 0, %s22
      %p19 = scmp.ge.s32.totalorder %s18, 4
      %s28 = sphi 0, %s30
      %s31 = sphi 0, %s28
      %s32 = sphi 0, %s31
      %s48 = sphi 0, %s32
      %s52 = sphi 0, %s52
      %s54 = sphi 0, %s52
      %s55 = sphi 0, %s54
      %s69 = sphi 0, %s55
      %s73 = sphi 0, %s73
      %s75 = sphi 0, %s73
      %s76 = sphi 0, %s75
      %s90 = sphi 0, %s76
      %s94 = sphi 0, %s94
      %s96 = sphi 0, %s94
      %s97 = sphi 0, %s96
      %s111 = sphi 0, %s97
      %s117 = sphi 0, %s119
      %s120 = sphi 0, %s117
      %s121 = sphi 0, %s120
      %s137 = sphi 0, %s121
    $region4: #{tpu_custom_call.1} parent=1 // loop_header_branch
      %21 = sbr.rel (%p19) target = $region8
    $region5: #{tpu_custom_call.1} parent=1 // loop_body
      %s23 = ssub.s32 %s18, 1
      %s24 = ssub.s32 %s18, 2
      %s25 = sadd.s32 %s18, 1
      %s26 = ssub.s32 %s18, %s25
      %p27 = scmp.eq.s32.totalorder %s26, 0
      %s29 = sadd.s32 %s28, 1
      %s30 = scalar_select %p27, %s28, %s29
      %p33 = pneg %p27
      %p34 = scmp.eq.s32.totalorder %s18, 1
      %p35 = por %p33, %p34
      %p36 = scmp.ne.s32.totalorder %s28, %s31
      %p37 = scmp.eq.s32.totalorder %s18, 0
      %p38 = por %p36, %p37
      %p39 = scmp.ne.s32.totalorder %s28, %s31
      %p40 = scmp.eq.s32.totalorder %s23, 1
      %p41 = por %p39, %p40
      %p42 = scmp.ne.s32.totalorder %s31, %s32
      %p43 = scmp.eq.s32.totalorder %s23, 0
      %p44 = por %p42, %p43
      %p45 = scmp.ne.s32.totalorder %s31, %s32
      %p46 = scmp.eq.s32.totalorder %s24, 1
      %p47 = por %p45, %p46
      %p49 = scmp.ne.s32.totalorder %s32, %s48
      %p50 = scmp.eq.s32.totalorder %s24, 0
      %p51 = por %p49, %p50
      %s53 = sadd.s32 %s52, 1
      %p56 = scmp.eq.s32.totalorder %s18, 1
      %p57 = scmp.ne.s32.totalorder %s52, %s54
      %p58 = scmp.eq.s32.totalorder %s18, 0
      %p59 = por %p57, %p58
      %p60 = scmp.ne.s32.totalorder %s52, %s54
      %p61 = scmp.eq.s32.totalorder %s23, 1
      %p62 = por %p60, %p61
      %p63 = scmp.ne.s32.totalorder %s54, %s55
      %p64 = scmp.eq.s32.totalorder %s23, 0
      %p65 = por %p63, %p64
      %p66 = scmp.ne.s32.totalorder %s54, %s55
      %p67 = scmp.eq.s32.totalorder %s24, 1
      %p68 = por %p66, %p67
      %p70 = scmp.ne.s32.totalorder %s55, %s69
      %p71 = scmp.eq.s32.totalorder %s24, 0
      %p72 = por %p70, %p71
      %s74 = sadd.s32 %s73, 1
      %p77 = scmp.eq.s32.totalorder %s18, 1
      %p78 = scmp.ne.s32.totalorder %s73, %s75
      %p79 = scmp.eq.s32.totalorder %s18, 0
      %p80 = por %p78, %p79
      %p81 = scmp.ne.s32.totalorder %s73, %s75
      %p82 = scmp.eq.s32.totalorder %s23, 1
      %p83 = por %p81, %p82
      %p84 = scmp.ne.s32.totalorder %s75, %s76
      %p85 = scmp.eq.s32.totalorder %s23, 0
      %p86 = por %p84, %p85
      %p87 = scmp.ne.s32.totalorder %s75, %s76
      %p88 = scmp.eq.s32.totalorder %s24, 1
      %p89 = por %p87, %p88
      %p91 = scmp.ne.s32.totalorder %s76, %s90
      %p92 = scmp.eq.s32.totalorder %s24, 0
      %p93 = por %p91, %p92
      %s95 = sadd.s32 %s94, 1
      %p98 = scmp.eq.s32.totalorder %s18, 1
      %p99 = scmp.ne.s32.totalorder %s94, %s96
      %p100 = scmp.eq.s32.totalorder %s18, 0
      %p101 = por %p99, %p100
      %p102 = scmp.ne.s32.totalorder %s94, %s96
      %p103 = scmp.eq.s32.totalorder %s23, 1
      %p104 = por %p102, %p103
      %p105 = scmp.ne.s32.totalorder %s96, %s97
      %p106 = scmp.eq.s32.totalorder %s23, 0
      %p107 = por %p105, %p106
      %p108 = scmp.ne.s32.totalorder %s96, %s97
      %p109 = scmp.eq.s32.totalorder %s24, 1
      %p110 = por %p108, %p109
      %p112 = scmp.ne.s32.totalorder %s97, %s111
      %p113 = scmp.eq.s32.totalorder %s24, 0
      %p114 = por %p112, %p113
      %s115 = ssub.s32 %s18, %s25
      %p116 = scmp.eq.s32.totalorder %s115, 0
      %s118 = sadd.s32 %s117, 1
      %s119 = scalar_select %p116, %s117, %s118
      %p122 = pneg %p116
      %p123 = scmp.eq.s32.totalorder %s18, 1
      %p124 = por %p122, %p123
      %p125 = scmp.ne.s32.totalorder %s117, %s120
      %p126 = scmp.eq.s32.totalorder %s18, 0
      %p127 = por %p125, %p126
      %p128 = scmp.ne.s32.totalorder %s117, %s120
      %p129 = scmp.eq.s32.totalorder %s23, 1
      %p130 = por %p128, %p129
      %p131 = scmp.ne.s32.totalorder %s120, %s121
      %p132 = scmp.eq.s32.totalorder %s23, 0
      %p133 = por %p131, %p132
      %p134 = scmp.ne.s32.totalorder %s120, %s121
      %p135 = scmp.eq.s32.totalorder %s24, 1
      %p136 = por %p134, %p135
      %p138 = scmp.ne.s32.totalorder %s121, %s137
      %p139 = scmp.eq.s32.totalorder %s24, 0
      %p140 = por %p138, %p139
      %p141 = scmp.le.s32.totalorder 1, %s18
      %p142 = scmp.lt.s32.totalorder %s18, 3
      %p143 = pnand %p141, %p142
      %p144 = pneg %p143
      // Predicated region
      $region9: #{tpu_custom_call.1} parent=5 // pred_check
        _
      $region10: #{tpu_custom_call.1} parent=5 // pred_check_branch
        %146 = sbr.rel (%p143) target = $region12
      $region11: #{tpu_custom_call.1} parent=5 // pred_region
        %s147 = ssub.s32 %s18, 1
        // Predicated region
        $region13: #{tpu_custom_call.1} parent=11 // pred_check
          %p148 = pneg %p65
        $region14: #{tpu_custom_call.1} parent=11 // pred_check_branch
          %150 = sbr.rel (%p148) target = $region16
        $region15: #{tpu_custom_call.1} parent=11 // pred_region
          %s152 = ssub.s32 1024, 1024
          %153 = vsyncadd [#allocation6], %s152
          %s154 = sshll.u32 [#allocation5], 4
          %s155 = int_to_ptr.vmem [resolvable:$true] %s154
          %160 = dma.hbm_to_vmem [thread:$0]  %s1, 1024, %s155, [#allocation6], 64, 64, 4
        $region16: #{tpu_custom_call.1} parent=11 // pred_fallthru
          _
        // Predicated region
        $region17: #{tpu_custom_call.1} parent=11 // pred_check
          %p161 = pneg %p86
        $region18: #{tpu_custom_call.1} parent=11 // pred_check_branch
          %163 = sbr.rel (%p161) target = $region20
        $region19: #{tpu_custom_call.1} parent=11 // pred_region
          %s165 = ssub.s32 1024, 1024
          %166 = vsyncadd [#allocation6], %s165
          %s167 = sshll.u32 [#allocation7], 4
          %s168 = int_to_ptr.vmem [resolvable:$true] %s167
          %173 = dma.hbm_to_vmem [thread:$0]  %s2, 1024, %s168, [#allocation6], 64, 64, 4
        $region20: #{tpu_custom_call.1} parent=11 // pred_fallthru
          _
        // Predicated region
        $region21: #{tpu_custom_call.1} parent=11 // pred_check
          %p174 = pneg %p107
        $region22: #{tpu_custom_call.1} parent=11 // pred_check_branch
          %176 = sbr.rel (%p174) target = $region24
        $region23: #{tpu_custom_call.1} parent=11 // pred_region
          %s178 = ssub.s32 128, 128
          %179 = vsyncadd [#allocation9], %s178
          %s181 = sshll.u32 [#allocation8], 4
          %s182 = int_to_ptr.vmem [resolvable:$true] %s181
          %184 = dma.hbm_to_vmem [thread:$0]  %s3, 128, %s182, [#allocation9]
        $region24: #{tpu_custom_call.1} parent=11 // pred_fallthru
          _
      $region12: #{tpu_custom_call.1} parent=5 // pred_fallthru
        _
      %p185 = scmp.lt.s32.totalorder %s18, 2
      // Predicated region
      $region25: #{tpu_custom_call.1} parent=5 // pred_check
        %p186 = pneg %p185
      $region26: #{tpu_custom_call.1} parent=5 // pred_check_branch
        %188 = sbr.rel (%p186) target = $region28
      $region27: #{tpu_custom_call.1} parent=5 // pred_region
        // Predicated region
        $region29: #{tpu_custom_call.1} parent=27 // pred_check
          %p189 = pneg %p38
        $region30: #{tpu_custom_call.1} parent=27 // pred_check_branch
          %191 = sbr.rel (%p189) target = $region32
        $region31: #{tpu_custom_call.1} parent=27 // pred_region
          %s192 = sand.u32 %s28, 1
          %s193 = scalar_lea.sflag [#allocation3], %s192
          %s194 = sand.u32 %s28, 1
          %s195 = smul.addr %s194, 4
          %s196 = scalar_lea.vmem [#allocation2], %s195
          %s198 = ssub.s32 64, 64
          %199 = vsyncadd %s193, %s198
          %s200 = smul.addr %s18, 64
          %s201 = scalar_lea.hbm %s0, %s200
          %s203 = sshll.u32 %s196, 4
          %s204 = int_to_ptr.vmem [resolvable:$true] %s203
          %206 = dma.hbm_to_vmem [thread:$0]  %s201, 64, %s204, %s193
        $region32: #{tpu_custom_call.1} parent=27 // pred_fallthru
          _
      $region28: #{tpu_custom_call.1} parent=5 // pred_fallthru
        _
      %p207 = scmp.le.s32.totalorder 1, %s18
      %p208 = scmp.lt.s32.totalorder %s18, 3
      %p209 = pnand %p207, %p208
      %p210 = pneg %p209
      // Predicated region
      $region33: #{tpu_custom_call.1} parent=5 // pred_check
        _
      $region34: #{tpu_custom_call.1} parent=5 // pred_check_branch
        %212 = sbr.rel (%p209) target = $region36
      $region35: #{tpu_custom_call.1} parent=5 // pred_region
        %s213 = ssub.s32 %s18, 1
        %s214 = sand.u32 %s31, 1
        %s215 = scalar_lea.sflag [#allocation3], %s214
        %s216 = sand.u32 %s31, 1
        %s217 = smul.addr %s216, 4
        %s218 = scalar_lea.vmem [#allocation2], %s217
        // Predicated region
        $region37: #{tpu_custom_call.1} parent=35 // pred_check
          %p219 = pneg %p44
        $region38: #{tpu_custom_call.1} parent=35 // pred_check_branch
          %221 = sbr.rel (%p219) target = $region40
        $region39: #{tpu_custom_call.1} parent=35 // pred_region
          %222 = dma.done %s215, 64
        $region40: #{tpu_custom_call.1} parent=35 // pred_fallthru
          _
        // Predicated region
        $region41: #{tpu_custom_call.1} parent=35 // pred_check
          %p223 = pneg %p65
        $region42: #{tpu_custom_call.1} parent=35 // pred_check_branch
          %225 = sbr.rel (%p223) target = $region44
        $region43: #{tpu_custom_call.1} parent=35 // pred_region
          %226 = dma.done [#allocation6], 1024
        $region44: #{tpu_custom_call.1} parent=35 // pred_fallthru
          _
        // Predicated region
        $region45: #{tpu_custom_call.1} parent=35 // pred_check
          %p227 = pneg %p86
        $region46: #{tpu_custom_call.1} parent=35 // pred_check_branch
          %229 = sbr.rel (%p227) target = $region48
        $region47: #{tpu_custom_call.1} parent=35 // pred_region
          %230 = dma.done [#allocation6], 1024
        $region48: #{tpu_custom_call.1} parent=35 // pred_fallthru
          _
        // Predicated region
        $region49: #{tpu_custom_call.1} parent=35 // pred_check
          %p231 = pneg %p107
        $region50: #{tpu_custom_call.1} parent=35 // pred_check_branch
          %233 = sbr.rel (%p231) target = $region52
        $region51: #{tpu_custom_call.1} parent=35 // pred_region
          %234 = dma.done [#allocation9], 128
        $region52: #{tpu_custom_call.1} parent=35 // pred_fallthru
          _
        %s235 = sand.u32 %s31, 1
        %s236 = scalar_lea.sflag [#allocation3], %s235
        %s237 = sand.u32 %s31, 1
        %s238 = smul.addr %s237, 4
        %s239 = scalar_lea.vmem [#allocation2], %s238
        %p240 = pneg %p44
        %p241 = pneg %p41
        %p242 = pneg %p65
        %p243 = pneg %p62
        %p244 = pneg %p86
        %p245 = pneg %p83
        %p246 = pneg %p107
        %p247 = pneg %p104
        %p248 = pneg %p133
        %p249 = pneg %p130
        %s250 = sand.u32 %s120, 1
        %s251 = scalar_lea.sflag [#allocation4], %s250
        %s252 = sand.u32 %s120, 1
        %s253 = smul.addr %s252, 8
        %s254 = scalar_lea.vmem [#allocation10], %s253
        %v256 = vld [vmem:[#allocation5] sm:$0xf]
        %v257 = vld [vmem:[#allocation5 + $0x4] sm:$0xf]
        %v258 = vld [vmem:[#allocation5 + $0x8] sm:$0xf]
        %v259 = vld [vmem:[#allocation5 + $0xc] sm:$0xf]
        %v260 = vld [vmem:[#allocation5 + $0x10] sm:$0xf]
        %v261 = vld [vmem:[#allocation5 + $0x14] sm:$0xf]
        %v262 = vld [vmem:[#allocation5 + $0x18] sm:$0xf]
        %v263 = vld [vmem:[#allocation5 + $0x1c] sm:$0xf]
        %v264 = vld [vmem:[#allocation5 + $0x20] sm:$0xf]
        %v265 = vld [vmem:[#allocation5 + $0x24] sm:$0xf]
        %v266 = vld [vmem:[#allocation5 + $0x28] sm:$0xf]
        %v267 = vld [vmem:[#allocation5 + $0x2c] sm:$0xf]
        %v268 = vld [vmem:[#allocation5 + $0x30] sm:$0xf]
        %v269 = vld [vmem:[#allocation5 + $0x34] sm:$0xf]
        %v270 = vld [vmem:[#allocation5 + $0x38] sm:$0xf]
        %v271 = vld [vmem:[#allocation5 + $0x3c] sm:$0xf]
        %v272 = vld [vmem:[#allocation7] sm:$0xf]
        %v273 = vld [vmem:[#allocation7 + $0x4] sm:$0xf]
        %v274 = vld [vmem:[#allocation7 + $0x8] sm:$0xf]
        %v275 = vld [vmem:[#allocation7 + $0xc] sm:$0xf]
        %v276 = vld [vmem:[#allocation7 + $0x10] sm:$0xf]
        %v277 = vld [vmem:[#allocation7 + $0x14] sm:$0xf]
        %v278 = vld [vmem:[#allocation7 + $0x18] sm:$0xf]
        %v279 = vld [vmem:[#allocation7 + $0x1c] sm:$0xf]
        %v280 = vld [vmem:[#allocation7 + $0x20] sm:$0xf]
        %v281 = vld [vmem:[#allocation7 + $0x24] sm:$0xf]
        %v282 = vld [vmem:[#allocation7 + $0x28] sm:$0xf]
        %v283 = vld [vmem:[#allocation7 + $0x2c] sm:$0xf]
        %v284 = vld [vmem:[#allocation7 + $0x30] sm:$0xf]
        %v285 = vld [vmem:[#allocation7 + $0x34] sm:$0xf]
        %v286 = vld [vmem:[#allocation7 + $0x38] sm:$0xf]
        %v287 = vld [vmem:[#allocation7 + $0x3c] sm:$0xf]
        %v288 = vld [vmem:[#allocation8] sm:$0xff]
        %v289 = vld [vmem:[%s218] sm:$0xf]
        %v290 = vunpack.c.l.bf16 %v289
        %v291 = vlaneseq
        %v292 = vshrl.u32 %v291, 7
        %v293 = vsub.s32 0, %v292
        %v294 = vrot.slane %v288, %v293
        %v311 = vunpack.c.l.b16 %v256
        %v312 = vunpack.c.l.b16 %v257
        %v313 = vunpack.c.l.b16 %v258
        %v314 = vunpack.c.l.b16 %v259
        %v315 = vunpack.c.l.b16 %v260
        %v316 = vunpack.c.l.b16 %v261
        %v317 = vunpack.c.l.b16 %v262
        %v318 = vunpack.c.l.b16 %v263
        %v319 = vunpack.c.l.b16 %v264
        %v320 = vunpack.c.l.b16 %v265
        %v321 = vunpack.c.l.b16 %v266
        %v322 = vunpack.c.l.b16 %v267
        %v323 = vunpack.c.l.b16 %v268
        %v324 = vunpack.c.l.b16 %v269
        %v325 = vunpack.c.l.b16 %v270
        %v326 = vunpack.c.l.b16 %v271
        %v327 = vpack.c.b16 %v312, %v311
        %v328 = vpack.c.b16 %v314, %v313
        %v329 = vpack.c.b16 %v316, %v315
        %v330 = vpack.c.b16 %v318, %v317
        %v331 = vpack.c.b16 %v320, %v319
        %v332 = vpack.c.b16 %v322, %v321
        %v333 = vpack.c.b16 %v324, %v323
        %v334 = vpack.c.b16 %v326, %v325
        %343 = vmatprep.subr.bf16.mxu0 0
        %344 = vmatpush1.bf16.msra.mxu0 %v334
        %345 = vmatprep.subr.bf16.mxu0 0
        %346 = vmatpush1.bf16.msra.mxu0 %v333
        %347 = vmatprep.subr.bf16.mxu0 0
        %348 = vmatpush1.bf16.msra.mxu0 %v332
        %349 = vmatprep.subr.bf16.mxu0 0
        %350 = vmatpush1.bf16.msra.mxu0 %v331
        %351 = vmatprep.subr.bf16.mxu0 0
        %352 = vmatpush1.bf16.msra.mxu0 %v330
        %353 = vmatprep.subr.bf16.mxu0 0
        %354 = vmatpush1.bf16.msra.mxu0 %v329
        %355 = vmatprep.subr.bf16.mxu0 0
        %356 = vmatpush1.bf16.msra.mxu0 %v328
        %357 = vmatprep.subr.bf16.mxu0 0
        %358 = vmatpush1.bf16.msra.mxu0 %v327
        %359 = vmatprep.subr.bf16.mxu0 0
        %360 = vmatpush2.bf16.msra.mxu0 0
        %361 = vmatprep.subr.bf16.mxu0 0
        %362 = vmatpush2.bf16.msra.mxu0 0
        %363 = vmatprep.subr.bf16.mxu0 0
        %364 = vmatpush2.bf16.msra.mxu0 0
        %365 = vmatprep.subr.bf16.mxu0 0
        %366 = vmatpush2.bf16.msra.mxu0 0
        %367 = vmatprep.subr.bf16.mxu0 0
        %368 = vmatpush2.bf16.msra.mxu0 0
        %369 = vmatprep.subr.bf16.mxu0 0
        %370 = vmatpush2.bf16.msra.mxu0 0
        %371 = vmatprep.subr.bf16.mxu0 0
        %372 = vmatpush2.bf16.msra.mxu0 0
        %373 = vmatprep.subr.bf16.mxu0 0
        %374 = vmatpush2.bf16.msra.mxu0 0
        %375 = vmatprep.mubr.bf16.mxu0 0
        %376 = vmatmul.mubr.bf16.gmra.mxu0 %v289
        %v377 = vpop.f32.mrf.mxu0
        %v378 = vadd.f32 %v294, %v377
        %v379 = vpop.f32.mrf.mxu0
        %v380 = vpop.f32.mrf.mxu0
        %v381 = vpop.f32.mrf.mxu0
        %382 = vdwg.mxu0
        %v383 = vmax.f32 %v378, 0.0
        %384 = vadd.xlane.f32.xlu0 %v383
        %v385 = vpop.xlane.xlu0 %384
        %v386 = vmul.f32 %v383, %v383
        %387 = vadd.xlane.f32.xlu0 %v386
        %v388 = vpop.xlane.xlu0 %387
        %v389 = vmul.f32 %v385, 0.03125
        %v390 = vmul.f32 %v388, 0.03125
        %v391 = vmul.f32 %v389, %v389
        %v392 = vsub.f32 %v390, %v391
        %v393 = vmax.f32 %v392, 0.0
        %v394 = vsub.f32 %v383, %v389
        %v395 = vadd.f32 %v393, 1e-05
        %v396 = vrsqrt.pop %v395
        %v397 = vmul.f32 %v394, %v396
        %v398 = vpack.c.bf16 %v397, %v397
        %v399 = vlaneseq
        %v400 = vshrl.u32 %v399, 7
        %v401 = vsub.s32 1, %v400
        %v402 = vrot.slane %v288, %v401
        %v419 = vunpack.c.l.b16 %v272
        %v420 = vunpack.c.l.b16 %v273
        %v421 = vunpack.c.l.b16 %v274
        %v422 = vunpack.c.l.b16 %v275
        %v423 = vunpack.c.l.b16 %v276
        %v424 = vunpack.c.l.b16 %v277
        %v425 = vunpack.c.l.b16 %v278
        %v426 = vunpack.c.l.b16 %v279
        %v427 = vunpack.c.l.b16 %v280
        %v428 = vunpack.c.l.b16 %v281
        %v429 = vunpack.c.l.b16 %v282
        %v430 = vunpack.c.l.b16 %v283
        %v431 = vunpack.c.l.b16 %v284
        %v432 = vunpack.c.l.b16 %v285
        %v433 = vunpack.c.l.b16 %v286
        %v434 = vunpack.c.l.b16 %v287
        %v435 = vpack.c.b16 %v420, %v419
        %v436 = vpack.c.b16 %v422, %v421
        %v437 = vpack.c.b16 %v424, %v423
        %v438 = vpack.c.b16 %v426, %v425
        %v439 = vpack.c.b16 %v428, %v427
        %v440 = vpack.c.b16 %v430, %v429
        %v441 = vpack.c.b16 %v432, %v431
        %v442 = vpack.c.b16 %v434, %v433
        %451 = vmatprep.subr.bf16.mxu0 0
        %452 = vmatpush1.bf16.msra.mxu0 %v442
        %453 = vmatprep.subr.bf16.mxu0 0
        %454 = vmatpush1.bf16.msra.mxu0 %v441
        %455 = vmatprep.subr.bf16.mxu0 0
        %456 = vmatpush1.bf16.msra.mxu0 %v440
        %457 = vmatprep.subr.bf16.mxu0 0
        %458 = vmatpush1.bf16.msra.mxu0 %v439
        %459 = vmatprep.subr.bf16.mxu0 0
        %460 = vmatpush1.bf16.msra.mxu0 %v438
        %461 = vmatprep.subr.bf16.mxu0 0
        %462 = vmatpush1.bf16.msra.mxu0 %v437
        %463 = vmatprep.subr.bf16.mxu0 0
        %464 = vmatpush1.bf16.msra.mxu0 %v436
        %465 = vmatprep.subr.bf16.mxu0 0
        %466 = vmatpush1.bf16.msra.mxu0 %v435
        %467 = vmatprep.subr.bf16.mxu0 0
        %468 = vmatpush2.bf16.msra.mxu0 0
        %469 = vmatprep.subr.bf16.mxu0 0
        %470 = vmatpush2.bf16.msra.mxu0 0
        %471 = vmatprep.subr.bf16.mxu0 0
        %472 = vmatpush2.bf16.msra.mxu0 0
        %473 = vmatprep.subr.bf16.mxu0 0
        %474 = vmatpush2.bf16.msra.mxu0 0
        %475 = vmatprep.subr.bf16.mxu0 0
        %476 = vmatpush2.bf16.msra.mxu0 0
        %477 = vmatprep.subr.bf16.mxu0 0
        %478 = vmatpush2.bf16.msra.mxu0 0
        %479 = vmatprep.subr.bf16.mxu0 0
        %480 = vmatpush2.bf16.msra.mxu0 0
        %481 = vmatprep.subr.bf16.mxu0 0
        %482 = vmatpush2.bf16.msra.mxu0 0
        %483 = vmatprep.mubr.bf16.mxu0 0
        %484 = vmatmul.mubr.bf16.gmra.mxu0 %v398
        %v485 = vpop.f32.mrf.mxu0
        %v486 = vadd.f32 %v402, %v485
        %v487 = vpop.f32.mrf.mxu0
        %v488 = vpop.f32.mrf.mxu0
        %v489 = vpop.f32.mrf.mxu0
        %490 = vdwg.mxu0
        %v491 = vmax.f32 %v486, 0.0
        %492 = vadd.xlane.f32.xlu0 %v491
        %v493 = vpop.xlane.xlu0 %492
        %v494 = vmul.f32 %v491, %v491
        %495 = vadd.xlane.f32.xlu0 %v494
        %v496 = vpop.xlane.xlu0 %495
        %v497 = vmul.f32 %v493, 0.03125
        %v498 = vmul.f32 %v496, 0.03125
        %v499 = vmul.f32 %v497, %v497
        %v500 = vsub.f32 %v498, %v499
        %v501 = vmax.f32 %v500, 0.0
        %v502 = vsub.f32 %v491, %v497
        %v503 = vadd.f32 %v501, 1e-05
        %v504 = vrsqrt.pop %v503
        %v505 = vmul.f32 %v502, %v504
        %v506 = vlaneseq
        %v507 = vshrl.u32 %v506, 7
        %v508 = vsub.s32 2, %v507
        %v509 = vrot.slane %v288, %v508
        %v510 = vmul.f32 %v505, %v509
        %v511 = vlaneseq
        %v512 = vshrl.u32 %v511, 7
        %v513 = vsub.s32 3, %v512
        %v514 = vrot.slane %v288, %v513
        %v515 = vadd.f32 %v510, %v514
        %v516 = vadd.f32 %v290, %v515
        %517 = vst [vmem:[%s254] sm:$0xff] %v516
        %s518 = sand.u32 %s120, 1
        %s519 = scalar_lea.sflag [#allocation4], %s518
        %s520 = sand.u32 %s120, 1
        %s521 = smul.addr %s520, 8
        %s522 = scalar_lea.vmem [#allocation10], %s521
        // Predicated region
        $region53: #{tpu_custom_call.1} parent=35 // pred_check
          %p523 = pneg %p130
        $region54: #{tpu_custom_call.1} parent=35 // pred_check_branch
          %525 = sbr.rel (%p523) target = $region56
        $region55: #{tpu_custom_call.1} parent=35 // pred_region
          %s527 = ssub.s32 128, 128
          %528 = vsyncadd %s519, %s527
          %s529 = smul.addr %s23, 128
          %s530 = scalar_lea.hbm %s4, %s529
          %s532 = sshll.u32 %s522, 4
          %s533 = int_to_ptr.vmem [resolvable:$true] %s532
          %535 = dma.vmem_to_hbm [thread:$0]  %s533, 128, %s530, %s519
        $region56: #{tpu_custom_call.1} parent=35 // pred_fallthru
          _
      $region36: #{tpu_custom_call.1} parent=5 // pred_fallthru
        _
      %p536 = scmp.le.s32.totalorder 2, %s18
      // Predicated region
      $region57: #{tpu_custom_call.1} parent=5 // pred_check
        %p537 = pneg %p536
      $region58: #{tpu_custom_call.1} parent=5 // pred_check_branch
        %539 = sbr.rel (%p537) target = $region60
      $region59: #{tpu_custom_call.1} parent=5 // pred_region
        %s540 = ssub.s32 %s18, 2
        // Predicated region
        $region61: #{tpu_custom_call.1} parent=59 // pred_check
          %p541 = pneg %p136
        $region62: #{tpu_custom_call.1} parent=59 // pred_check_branch
          %543 = sbr.rel (%p541) target = $region64
        $region63: #{tpu_custom_call.1} parent=59 // pred_region
          %s544 = sand.u32 %s121, 1
          %s545 = scalar_lea.sflag [#allocation4], %s544
          %s546 = sand.u32 %s121, 1
          %s547 = smul.addr %s546, 8
          %s548 = scalar_lea.vmem [#allocation10], %s547
          %549 = dma.done %s545, 128
        $region64: #{tpu_custom_call.1} parent=59 // pred_fallthru
          _
      $region60: #{tpu_custom_call.1} parent=5 // pred_fallthru
        _
    $region6: #{tpu_custom_call.1} parent=1 // loop_footer
      %s22 = sadd.s32 1, %s18
    $region7: #{tpu_custom_call.1} parent=1 // loop_footer_branch
      %17 = sbr.rel target = $region3
    $region8: #{tpu_custom_call.1} parent=1 // loop_exit
      _
    %550 = vsyncpa [#allocation3], 1
    %s551 = scalar_lea.sflag [#allocation3], 1
    %552 = vsyncpa %s551, 1
    %553 = vsyncpa [#allocation6], 1
    %554 = vsyncpa [#allocation9], 1
    %555 = vsyncpa [#allocation4], 1
    %s556 = scalar_lea.sflag [#allocation4], 1
    %557 = vsyncpa %s556, 1

</llo_original>
